<compile_context>
chip_gen: v5e
topology: v5e:2x2
jax: 0.10.0
libtpu: 0.0.40
codegen_flags: <defaults>
</compile_context>

<pallas_src>
import functools

import jax
import jax.numpy as jnp
from jax import lax
from jax.experimental import pallas as pl
from jax.experimental.pallas import tpu as pltpu


def _ffn_kernel(x_ref, w1_ref, b1_ref, w2_ref, b2_ref, gamma_ref, beta_ref,
                o_ref, *, eps, h_chunk):
    x_in = x_ref[...]                                  # (TM, D), native dtype -> MXU feed
    x_f32 = x_in.astype(jnp.float32)                   # residual / LayerNorm in f32

    tm, d = x_in.shape
    h_total = w1_ref.shape[1]

    # y = relu(x @ W1 + b1) @ W2 with f32 accumulation.
    if h_chunk >= h_total:
        # Single-chunk fast path (no zero-accumulator, no loop).
        h = jnp.dot(x_in, w1_ref[...], preferred_element_type=jnp.float32)
        h = jnp.maximum(h + b1_ref[...].astype(jnp.float32), 0.0)
        y = jnp.dot(h.astype(w2_ref.dtype), w2_ref[...],
                    preferred_element_type=jnp.float32)
    else:
        # Chunked over the hidden dim so the (TM, H) intermediate never fully
        # materializes.  fori_loop (not an unrolled Python loop) bounds live ranges.
        n_full = h_total // h_chunk
        rem = h_total - n_full * h_chunk
        aligned = (h_chunk % 128 == 0)

        def body(c, acc):
            lo = c * h_chunk
            if aligned:
                lo = pl.multiple_of(lo, 128)
            h = jnp.dot(x_in, w1_ref[:, pl.ds(lo, h_chunk)],
                        preferred_element_type=jnp.float32)
            h = jnp.maximum(h + b1_ref[:, pl.ds(lo, h_chunk)].astype(jnp.float32), 0.0)
            return acc + jnp.dot(h.astype(w2_ref.dtype),
                                 w2_ref[pl.ds(lo, h_chunk), :],
                                 preferred_element_type=jnp.float32)

        y = lax.fori_loop(0, n_full, body, jnp.zeros((tm, d), jnp.float32))
        if rem:                                        # static tail chunk
            lo = n_full * h_chunk
            h = jnp.dot(x_in, w1_ref[:, lo:], preferred_element_type=jnp.float32)
            h = jnp.maximum(h + b1_ref[:, lo:].astype(jnp.float32), 0.0)
            y = y + jnp.dot(h.astype(w2_ref.dtype), w2_ref[lo:, :],
                            preferred_element_type=jnp.float32)

    y = y + b2_ref[...].astype(jnp.float32)

    # dropout (eval mode) == identity, then residual.
    z = y + x_f32

    # LayerNorm with torch semantics: unbiased std (N-1), eps added to std.
    mean = jnp.mean(z, axis=-1, keepdims=True)
    centered = z - mean
    var_unbiased = jnp.sum(centered * centered, axis=-1, keepdims=True) / (d - 1)
    inv = pl.reciprocal(jnp.sqrt(var_unbiased) + eps, approx=True)   # EUP slot
    out = (gamma_ref[...].astype(jnp.float32) * centered * inv
           + beta_ref[...].astype(jnp.float32))

    o_ref[...] = out.astype(o_ref.dtype)


def _vmem_limit_bytes():
    cap = 64 * 1024 * 1024                             # conservative default (v7x per-TC)
    try:
        info = pltpu.get_tpu_info()
        cap = int(getattr(info, "vmem_capacity_bytes", cap) or cap)
    except Exception:
        pass
    # Leave headroom for compiler scratch: 5/8 of physical, capped at 64 MiB.
    # v7x (64 MiB) -> 40 MiB; v5e/v6e (128 MiB) -> 64 MiB.
    return min((cap * 5) // 8, 64 * 1024 * 1024)


def positionwise_feed_forward(x, w1, b1, w2, b2, gamma, beta, eps=1e-6,
                              block_m=512, h_chunk_max=2048):
    """x: (B, S, d_in).  w1: (d_in, d_hid), w2: (d_hid, d_in) (pre-transposed
    relative to nn.Linear storage so the kernel does row-major matmuls).
    For best MXU throughput pass x/w1/w2 in bfloat16; biases/gamma/beta stay f32."""
    B, S, D = x.shape
    H = w1.shape[1]
    M = B * S
    x2d = x.reshape(M, D)

    vmem_limit = _vmem_limit_bytes()

    # Row tile: keep the grid length >= 2 when possible so ("parallel",) actually
    # splits across both v7x TensorCores; otherwise a multiple-of-8 block_m tile.
    if M <= block_m:
        half = (((M + 1) // 2) + 7) // 8 * 8
        tm = half if (8 <= half < M) else M
    else:
        tm = block_m

    # Hidden chunk (multiple of 128 whenever the chunked path is taken).
    h_chunk = H if H <= h_chunk_max else h_chunk_max

    # VMEM fit estimate: weights single-buffered (pl.Buffered(1)), x/out tiles
    # double-buffered by the pipeline, plus f32 intermediates.  Shrink TM then
    # h_chunk if the estimate exceeds the per-TC budget.
    w_bytes = (D * H) * w1.dtype.itemsize + (H * D) * w2.dtype.itemsize \
        + H * b1.dtype.itemsize \
        + D * (b2.dtype.itemsize + gamma.dtype.itemsize + beta.dtype.itemsize)

    def _est(tm_, hc_):
        tiles = 2 * 2 * tm_ * D * x.dtype.itemsize     # x + out, double-buffered
        live = tm_ * hc_ * 4 + 4 * tm_ * D * 4         # hidden f32 + f32 temporaries
        return w_bytes + tiles + live

    while _est(tm, h_chunk) > vmem_limit and tm > 64 and tm % 16 == 0:
        tm //= 2
    while _est(tm, h_chunk) > vmem_limit and h_chunk > 256 and h_chunk % 256 == 0:
        h_chunk //= 2

    # 1-row 2-D views for broadcast-friendly TPU layout.
    b1r = b1.reshape(1, H)
    b2r = b2.reshape(1, D)
    gr = gamma.reshape(1, D)
    br = beta.reshape(1, D)

    kernel = functools.partial(_ffn_kernel, eps=eps, h_chunk=h_chunk)
    resident = dict(pipeline_mode=pl.Buffered(1))       # constant index_map -> 1 buffer

    cost = pl.CostEstimate(
        flops=4 * M * D * H,                            # two M*D*H matmuls
        transcendentals=2 * M,                          # sqrt + reciprocal per row
        bytes_accessed=w_bytes + 2 * M * D * x.dtype.itemsize)

    out2d = pl.pallas_call(
        kernel,
        out_shape=jax.ShapeDtypeStruct((M, D), x.dtype),
        grid=(pl.cdiv(M, tm),),
        in_specs=[
            pl.BlockSpec((tm, D), lambda i: (i, 0)),                 # x: streamed over M
            pl.BlockSpec((D, H), lambda i: (0, 0), **resident),      # W1: VMEM-resident
            pl.BlockSpec((1, H), lambda i: (0, 0), **resident),      # b1
            pl.BlockSpec((H, D), lambda i: (0, 0), **resident),      # W2: VMEM-resident
            pl.BlockSpec((1, D), lambda i: (0, 0), **resident),      # b2
            pl.BlockSpec((1, D), lambda i: (0, 0), **resident),      # gamma
            pl.BlockSpec((1, D), lambda i: (0, 0), **resident),      # beta
        ],
        out_specs=pl.BlockSpec((tm, D), lambda i: (i, 0)),
        compiler_params=pltpu.CompilerParams(
            dimension_semantics=("parallel",),           # megacore sharding on v7x
            vmem_limit_bytes=vmem_limit,
        ),
        cost_estimate=cost,
    )(x2d, w1, b1r, w2, b2r, gr, br)

    return out2d.reshape(B, S, D)


if __name__ == "__main__":
    # Small shapes consistent with the module: (batch, seq, d_in), hidden d_hid.
    # (Production benchmarking should use D>=512, H>=2048 so D/H are lane-dense.)
    B, S, d_in, d_hid = 2, 8, 32, 64

    key = jax.random.PRNGKey(0)
    kx, kw1, kb1, kw2, kb2 = jax.random.split(key, 5)

    x = jax.random.normal(kx, (B, S, d_in), dtype=jnp.float32)

    lim1 = 1.0 / (d_in ** 0.5)
    lim2 = 1.0 / (d_hid ** 0.5)
    w1 = jax.random.uniform(kw1, (d_in, d_hid), minval=-lim1, maxval=lim1, dtype=jnp.float32)
    b1 = jax.random.uniform(kb1, (d_hid,), minval=-lim1, maxval=lim1, dtype=jnp.float32)
    w2 = jax.random.uniform(kw2, (d_hid, d_in), minval=-lim2, maxval=lim2, dtype=jnp.float32)
    b2 = jax.random.uniform(kb2, (d_in,), minval=-lim2, maxval=lim2, dtype=jnp.float32)
    gamma = jnp.ones((d_in,), dtype=jnp.float32)
    beta = jnp.zeros((d_in,), dtype=jnp.float32)

    # Pure-JAX reference (torch semantics: unbiased std, eps on std).
    def ref(xx):
        h = jnp.maximum(xx @ w1 + b1, 0.0)
        y = h @ w2 + b2
        z = y + xx
        mean = z.mean(-1, keepdims=True)
        std = jnp.sqrt(((z - mean) ** 2).sum(-1, keepdims=True) / (d_in - 1))
        return gamma * (z - mean) / (std + 1e-6) + beta

    ref_out = ref(x)

    # f32 path (tolerance loosened slightly for the approx EUP reciprocal).
    out = positionwise_feed_forward(x, w1, b1, w2, b2, gamma, beta)
    out = jax.block_until_ready(out)
    assert jnp.allclose(out, ref_out, atol=5e-3, rtol=5e-3), "f32 mismatch vs reference"

    # bf16 MXU path: activations + weights in bf16, f32 accumulation + epilogue.
    out_bf16 = positionwise_feed_forward(
        x.astype(jnp.bfloat16), w1.astype(jnp.bfloat16), b1,
        w2.astype(jnp.bfloat16), b2, gamma, beta)
    out_bf16 = jax.block_until_ready(out_bf16).astype(jnp.float32)
    assert jnp.allclose(out_bf16, ref_out, atol=7.5e-2, rtol=7.5e-2), "bf16 mismatch vs reference"

    print("KERNEL_OK")
</pallas_src>

<mosaic_0001>
module attributes {stable_mosaic.version = 11 : i64} {
  func.func @_ffn_kernel(%arg0: i32, %arg1: memref<8x32xf32, #tpu.memory_space<vmem>>, %arg2: memref<32x64xf32, #tpu.memory_space<vmem>>, %arg3: memref<1x64xf32, #tpu.memory_space<vmem>>, %arg4: memref<64x32xf32, #tpu.memory_space<vmem>>, %arg5: memref<1x32xf32, #tpu.memory_space<vmem>>, %arg6: memref<1x32xf32, #tpu.memory_space<vmem>>, %arg7: memref<1x32xf32, #tpu.memory_space<vmem>>, %arg8: memref<8x32xf32, #tpu.memory_space<vmem>>) attributes {dimension_semantics = [#tpu.dimension_semantics<parallel>], iteration_bounds = array<i64: 2>, scalar_prefetch = 0 : i64, scratch_operands = 0 : i64, tpu.core_type = #tpu.core_type<tc>, window_params = [{transform_indices = @transform_0, window_bounds = array<i64: 8, 32>}, {pipeline_mode = #tpu.pipeline_mode<synchronous>, transform_indices = @transform_1, window_bounds = array<i64: 32, 64>}, {pipeline_mode = #tpu.pipeline_mode<synchronous>, transform_indices = @transform_2, window_bounds = array<i64: 1, 64>}, {pipeline_mode = #tpu.pipeline_mode<synchronous>, transform_indices = @transform_3, window_bounds = array<i64: 64, 32>}, {pipeline_mode = #tpu.pipeline_mode<synchronous>, transform_indices = @transform_4, window_bounds = array<i64: 1, 32>}, {pipeline_mode = #tpu.pipeline_mode<synchronous>, transform_indices = @transform_5, window_bounds = array<i64: 1, 32>}, {pipeline_mode = #tpu.pipeline_mode<synchronous>, transform_indices = @transform_6, window_bounds = array<i64: 1, 32>}, {transform_indices = @transform_7, window_bounds = array<i64: 8, 32>}]} {
    %c0 = arith.constant 0 : index
    %c0_0 = arith.constant 0 : index
    %0 = vector.load %arg1[%c0, %c0_0] : memref<8x32xf32, #tpu.memory_space<vmem>>, vector<8x32xf32>
    %c0_1 = arith.constant 0 : index
    %c0_2 = arith.constant 0 : index
    %1 = vector.load %arg2[%c0_1, %c0_2] : memref<32x64xf32, #tpu.memory_space<vmem>>, vector<32x64xf32>
    %cst = arith.constant dense<0.000000e+00> : vector<8x64xf32>
    %2 = tpu.matmul %0, %1, %cst {dimension_numbers = #tpu.dot_dimension_numbers<[1], [0], [0], [1], [0, 0, 1, 1], [], []>} : vector<8x32xf32>, vector<32x64xf32>, vector<8x64xf32> -> vector<8x64xf32>
    %c0_3 = arith.constant 0 : index
    %c0_4 = arith.constant 0 : index
    %3 = vector.load %arg3[%c0_3, %c0_4] : memref<1x64xf32, #tpu.memory_space<vmem>>, vector<1x64xf32>
    %4 = vector.broadcast %3 : vector<1x64xf32> to vector<8x64xf32>
    %5 = arith.addf %2, %4 : vector<8x64xf32>
    %cst_5 = arith.constant 0.000000e+00 : f32
    %6 = vector.broadcast %cst_5 : f32 to vector<8x64xf32>
    %7 = arith.maximumf %5, %6 : vector<8x64xf32>
    %c0_6 = arith.constant 0 : index
    %c0_7 = arith.constant 0 : index
    %8 = vector.load %arg4[%c0_6, %c0_7] : memref<64x32xf32, #tpu.memory_space<vmem>>, vector<64x32xf32>
    %cst_8 = arith.constant dense<0.000000e+00> : vector<8x32xf32>
    %9 = tpu.matmul %7, %8, %cst_8 {dimension_numbers = #tpu.dot_dimension_numbers<[1], [0], [0], [1], [0, 0, 1, 1], [], []>} : vector<8x64xf32>, vector<64x32xf32>, vector<8x32xf32> -> vector<8x32xf32>
    %c0_9 = arith.constant 0 : index
    %c0_10 = arith.constant 0 : index
    %10 = vector.load %arg5[%c0_9, %c0_10] : memref<1x32xf32, #tpu.memory_space<vmem>>, vector<1x32xf32>
    %11 = vector.broadcast %10 : vector<1x32xf32> to vector<8x32xf32>
    %12 = arith.addf %9, %11 : vector<8x32xf32>
    %13 = arith.addf %12, %0 : vector<8x32xf32>
    %cst_11 = arith.constant dense<0.000000e+00> : vector<8xf32>
    %14 = vector.multi_reduction <add>, %13, %cst_11 [1] : vector<8x32xf32> to vector<8xf32>
    %15 = vector.shape_cast %14 : vector<8xf32> to vector<8x1xf32>
    %cst_12 = arith.constant 3.200000e+01 : f32
    %16 = vector.broadcast %cst_12 : f32 to vector<8x1xf32>
    %17 = arith.divf %15, %16 : vector<8x1xf32>
    %18 = vector.broadcast %17 : vector<8x1xf32> to vector<8x32xf32>
    %19 = arith.subf %13, %18 : vector<8x32xf32>
    %20 = arith.mulf %19, %19 : vector<8x32xf32>
    %cst_13 = arith.constant dense<0.000000e+00> : vector<8xf32>
    %21 = vector.multi_reduction <add>, %20, %cst_13 [1] : vector<8x32xf32> to vector<8xf32>
    %22 = vector.shape_cast %21 : vector<8xf32> to vector<8x1xf32>
    %cst_14 = arith.constant 3.100000e+01 : f32
    %23 = vector.broadcast %cst_14 : f32 to vector<8x1xf32>
    %24 = arith.divf %22, %23 : vector<8x1xf32>
    %25 = math.sqrt %24 : vector<8x1xf32>
    %cst_15 = arith.constant 9.99999997E-7 : f32
    %26 = vector.broadcast %cst_15 : f32 to vector<8x1xf32>
    %27 = arith.addf %25, %26 : vector<8x1xf32>
    %28 = tpu.reciprocal %27 {approx = true} : vector<8x1xf32> -> vector<8x1xf32>
    %c0_16 = arith.constant 0 : index
    %c0_17 = arith.constant 0 : index
    %29 = vector.load %arg6[%c0_16, %c0_17] : memref<1x32xf32, #tpu.memory_space<vmem>>, vector<1x32xf32>
    %30 = vector.broadcast %29 : vector<1x32xf32> to vector<8x32xf32>
    %31 = arith.mulf %30, %19 : vector<8x32xf32>
    %32 = vector.broadcast %28 : vector<8x1xf32> to vector<8x32xf32>
    %33 = arith.mulf %31, %32 : vector<8x32xf32>
    %c0_18 = arith.constant 0 : index
    %c0_19 = arith.constant 0 : index
    %34 = vector.load %arg7[%c0_18, %c0_19] : memref<1x32xf32, #tpu.memory_space<vmem>>, vector<1x32xf32>
    %35 = vector.broadcast %34 : vector<1x32xf32> to vector<8x32xf32>
    %36 = arith.addf %33, %35 : vector<8x32xf32>
    %c0_20 = arith.constant 0 : index
    %c0_21 = arith.constant 0 : index
    %37 = vector.load %arg8[%c0_20, %c0_21] : memref<8x32xf32, #tpu.memory_space<vmem>>, vector<8x32xf32>
    tpu.vector_store %arg8[%c0_20, %c0_21], %36 {strides = array<i32>} : memref<8x32xf32, #tpu.memory_space<vmem>>, vector<8x32xf32>,
    return
  }
  func.func @transform_0(%arg0: i32) -> (i32, i32) {
    %c0_i32 = arith.constant 0 : i32
    %c0_i32_0 = arith.constant 0 : i32
    return %arg0, %c0_i32 : i32, i32
  }
  func.func @transform_1(%arg0: i32) -> (i32, i32) {
    %c0_i32 = arith.constant 0 : i32
    %c0_i32_0 = arith.constant 0 : i32
    %c0_i32_1 = arith.constant 0 : i32
    return %c0_i32, %c0_i32_0 : i32, i32
  }
  func.func @transform_2(%arg0: i32) -> (i32, i32) {
    %c0_i32 = arith.constant 0 : i32
    %c0_i32_0 = arith.constant 0 : i32
    %c0_i32_1 = arith.constant 0 : i32
    return %c0_i32, %c0_i32_0 : i32, i32
  }
  func.func @transform_3(%arg0: i32) -> (i32, i32) {
    %c0_i32 = arith.constant 0 : i32
    %c0_i32_0 = arith.constant 0 : i32
    %c0_i32_1 = arith.constant 0 : i32
    return %c0_i32, %c0_i32_0 : i32, i32
  }
  func.func @transform_4(%arg0: i32) -> (i32, i32) {
    %c0_i32 = arith.constant 0 : i32
    %c0_i32_0 = arith.constant 0 : i32
    %c0_i32_1 = arith.constant 0 : i32
    return %c0_i32, %c0_i32_0 : i32, i32
  }
  func.func @transform_5(%arg0: i32) -> (i32, i32) {
    %c0_i32 = arith.constant 0 : i32
    %c0_i32_0 = arith.constant 0 : i32
    %c0_i32_1 = arith.constant 0 : i32
    return %c0_i32, %c0_i32_0 : i32, i32
  }
  func.func @transform_6(%arg0: i32) -> (i32, i32) {
    %c0_i32 = arith.constant 0 : i32
    %c0_i32_0 = arith.constant 0 : i32
    %c0_i32_1 = arith.constant 0 : i32
    return %c0_i32, %c0_i32_0 : i32, i32
  }
  func.func @transform_7(%arg0: i32) -> (i32, i32) {
    %c0_i32 = arith.constant 0 : i32
    %c0_i32_0 = arith.constant 0 : i32
    return %arg0, %c0_i32 : i32, i32
  }
}

</mosaic_0001>

<llo_original>
// kernel: tpu_custom_call.1
$region0: #{tpu_custom_call.1}
  #allocation0 [shape = 'u32[]', space=smem, size = 0x4, offset = 0x4, fixed_abs, tag = 'smem constant byte address 0x4 - core index']
  #allocation1 [shape = 'u32[72,128]{1,0:T(1,128)}', space=vmem, size = 0x9000, scoped, tag = 'internal scratch']
  %s0 = inlined_call_operand.vmem [shape: f32[16,32], index: 0, kind: input, shape index: {}]
  %s1 = inlined_call_operand.vmem [shape: f32[32,64], index: 1, kind: input, shape index: {}]
  %s2 = inlined_call_operand.vmem [shape: f32[1,64], index: 2, kind: input, shape index: {}]
  %s3 = inlined_call_operand.vmem [shape: f32[64,32], index: 3, kind: input, shape index: {}]
  %s4 = inlined_call_operand.vmem [shape: f32[1,32], index: 4, kind: input, shape index: {}]
  %s5 = inlined_call_operand.vmem [shape: f32[1,32], index: 5, kind: input, shape index: {}]
  %s6 = inlined_call_operand.vmem [shape: f32[1,32], index: 6, kind: input, shape index: {}]
  %s7 = inlined_call_operand.hbm [shape: f32[16,32], index: 7, kind: output, shape index: {}]
  %s8 = sld [smem:[#allocation0]]
  $region61: #{tpu_custom_call.1} parent=0
    _
  %s10 = ssub.s32 1, %s8
  %s11 = scalar_select 0, %s10, %s8
  $region1: #{tpu_custom_call.1} parent=0
    #allocation2 [shape = 'u8[8192]{0}', space=vmem, size = 0x2000, scoped, tag = 'output window, operand 0']
    #allocation3 [shape = 's32[2]{0}', space=sflag, size = 0x8, scoped, tag = 'scoped memory for tpu_custom_call.1']
    %12 = vsyncpa [#allocation3], 0
    %s13 = scalar_lea.sflag [#allocation3], 1
    %14 = vsyncpa %s13, 0
    loop: start=0, step=1, limit=4
    $region2: #{tpu_custom_call.1} parent=1 // loop_pre_header
      _
    $region3: #{tpu_custom_call.1} parent=1 // loop_header
      %s16 = sphi 0, %s20
      %p17 = scmp.ge.s32.totalorder %s16, 4
      %s26 = sphi 0, %s28
      %s29 = sphi 0, %s26
      %s30 = sphi 0, %s29
      %s46 = sphi 0, %s30
      %s50 = sphi 0, %s50
      %s52 = sphi 0, %s50
      %s53 = sphi 0, %s52
      %s67 = sphi 0, %s53
      %s71 = sphi 0, %s71
      %s73 = sphi 0, %s71
      %s74 = sphi 0, %s73
      %s88 = sphi 0, %s74
      %s92 = sphi 0, %s92
      %s94 = sphi 0, %s92
      %s95 = sphi 0, %s94
      %s109 = sphi 0, %s95
      %s113 = sphi 0, %s113
      %s115 = sphi 0, %s113
      %s116 = sphi 0, %s115
      %s130 = sphi 0, %s116
      %s134 = sphi 0, %s134
      %s136 = sphi 0, %s134
      %s137 = sphi 0, %s136
      %s151 = sphi 0, %s137
      %s155 = sphi 0, %s155
      %s157 = sphi 0, %s155
      %s158 = sphi 0, %s157
      %s172 = sphi 0, %s158
      %s178 = sphi 0, %s180
      %s181 = sphi 0, %s178
      %s182 = sphi 0, %s181
      %s198 = sphi 0, %s182
    $region4: #{tpu_custom_call.1} parent=1 // loop_header_branch
      %19 = sbr.rel (%p17) target = $region8
    $region5: #{tpu_custom_call.1} parent=1 // loop_body
      %s21 = ssub.s32 %s16, 1
      %s22 = ssub.s32 %s16, 2
      %s23 = sadd.s32 %s16, 1
      %s24 = ssub.s32 %s16, %s23
      %p25 = scmp.eq.s32.totalorder %s24, 0
      %s27 = sadd.s32 %s26, 1
      %s28 = scalar_select %p25, %s26, %s27
      %p31 = pneg %p25
      %p32 = scmp.eq.s32.totalorder %s16, 1
      %p33 = por %p31, %p32
      %p34 = scmp.ne.s32.totalorder %s26, %s29
      %p35 = scmp.eq.s32.totalorder %s16, 0
      %p36 = por %p34, %p35
      %p37 = scmp.ne.s32.totalorder %s26, %s29
      %p38 = scmp.eq.s32.totalorder %s21, 1
      %p39 = por %p37, %p38
      %p40 = scmp.ne.s32.totalorder %s29, %s30
      %p41 = scmp.eq.s32.totalorder %s21, 0
      %p42 = por %p40, %p41
      %p43 = scmp.ne.s32.totalorder %s29, %s30
      %p44 = scmp.eq.s32.totalorder %s22, 1
      %p45 = por %p43, %p44
      %p47 = scmp.ne.s32.totalorder %s30, %s46
      %p48 = scmp.eq.s32.totalorder %s22, 0
      %p49 = por %p47, %p48
      %s51 = sadd.s32 %s50, 1
      %p54 = scmp.eq.s32.totalorder %s16, 1
      %p55 = scmp.ne.s32.totalorder %s50, %s52
      %p56 = scmp.eq.s32.totalorder %s16, 0
      %p57 = por %p55, %p56
      %p58 = scmp.ne.s32.totalorder %s50, %s52
      %p59 = scmp.eq.s32.totalorder %s21, 1
      %p60 = por %p58, %p59
      %p61 = scmp.ne.s32.totalorder %s52, %s53
      %p62 = scmp.eq.s32.totalorder %s21, 0
      %p63 = por %p61, %p62
      %p64 = scmp.ne.s32.totalorder %s52, %s53
      %p65 = scmp.eq.s32.totalorder %s22, 1
      %p66 = por %p64, %p65
      %p68 = scmp.ne.s32.totalorder %s53, %s67
      %p69 = scmp.eq.s32.totalorder %s22, 0
      %p70 = por %p68, %p69
      %s72 = sadd.s32 %s71, 1
      %p75 = scmp.eq.s32.totalorder %s16, 1
      %p76 = scmp.ne.s32.totalorder %s71, %s73
      %p77 = scmp.eq.s32.totalorder %s16, 0
      %p78 = por %p76, %p77
      %p79 = scmp.ne.s32.totalorder %s71, %s73
      %p80 = scmp.eq.s32.totalorder %s21, 1
      %p81 = por %p79, %p80
      %p82 = scmp.ne.s32.totalorder %s73, %s74
      %p83 = scmp.eq.s32.totalorder %s21, 0
      %p84 = por %p82, %p83
      %p85 = scmp.ne.s32.totalorder %s73, %s74
      %p86 = scmp.eq.s32.totalorder %s22, 1
      %p87 = por %p85, %p86
      %p89 = scmp.ne.s32.totalorder %s74, %s88
      %p90 = scmp.eq.s32.totalorder %s22, 0
      %p91 = por %p89, %p90
      %s93 = sadd.s32 %s92, 1
      %p96 = scmp.eq.s32.totalorder %s16, 1
      %p97 = scmp.ne.s32.totalorder %s92, %s94
      %p98 = scmp.eq.s32.totalorder %s16, 0
      %p99 = por %p97, %p98
      %p100 = scmp.ne.s32.totalorder %s92, %s94
      %p101 = scmp.eq.s32.totalorder %s21, 1
      %p102 = por %p100, %p101
      %p103 = scmp.ne.s32.totalorder %s94, %s95
      %p104 = scmp.eq.s32.totalorder %s21, 0
      %p105 = por %p103, %p104
      %p106 = scmp.ne.s32.totalorder %s94, %s95
      %p107 = scmp.eq.s32.totalorder %s22, 1
      %p108 = por %p106, %p107
      %p110 = scmp.ne.s32.totalorder %s95, %s109
      %p111 = scmp.eq.s32.totalorder %s22, 0
      %p112 = por %p110, %p111
      %s114 = sadd.s32 %s113, 1
      %p117 = scmp.eq.s32.totalorder %s16, 1
      %p118 = scmp.ne.s32.totalorder %s113, %s115
      %p119 = scmp.eq.s32.totalorder %s16, 0
      %p120 = por %p118, %p119
      %p121 = scmp.ne.s32.totalorder %s113, %s115
      %p122 = scmp.eq.s32.totalorder %s21, 1
      %p123 = por %p121, %p122
      %p124 = scmp.ne.s32.totalorder %s115, %s116
      %p125 = scmp.eq.s32.totalorder %s21, 0
      %p126 = por %p124, %p125
      %p127 = scmp.ne.s32.totalorder %s115, %s116
      %p128 = scmp.eq.s32.totalorder %s22, 1
      %p129 = por %p127, %p128
      %p131 = scmp.ne.s32.totalorder %s116, %s130
      %p132 = scmp.eq.s32.totalorder %s22, 0
      %p133 = por %p131, %p132
      %s135 = sadd.s32 %s134, 1
      %p138 = scmp.eq.s32.totalorder %s16, 1
      %p139 = scmp.ne.s32.totalorder %s134, %s136
      %p140 = scmp.eq.s32.totalorder %s16, 0
      %p141 = por %p139, %p140
      %p142 = scmp.ne.s32.totalorder %s134, %s136
      %p143 = scmp.eq.s32.totalorder %s21, 1
      %p144 = por %p142, %p143
      %p145 = scmp.ne.s32.totalorder %s136, %s137
      %p146 = scmp.eq.s32.totalorder %s21, 0
      %p147 = por %p145, %p146
      %p148 = scmp.ne.s32.totalorder %s136, %s137
      %p149 = scmp.eq.s32.totalorder %s22, 1
      %p150 = por %p148, %p149
      %p152 = scmp.ne.s32.totalorder %s137, %s151
      %p153 = scmp.eq.s32.totalorder %s22, 0
      %p154 = por %p152, %p153
      %s156 = sadd.s32 %s155, 1
      %p159 = scmp.eq.s32.totalorder %s16, 1
      %p160 = scmp.ne.s32.totalorder %s155, %s157
      %p161 = scmp.eq.s32.totalorder %s16, 0
      %p162 = por %p160, %p161
      %p163 = scmp.ne.s32.totalorder %s155, %s157
      %p164 = scmp.eq.s32.totalorder %s21, 1
      %p165 = por %p163, %p164
      %p166 = scmp.ne.s32.totalorder %s157, %s158
      %p167 = scmp.eq.s32.totalorder %s21, 0
      %p168 = por %p166, %p167
      %p169 = scmp.ne.s32.totalorder %s157, %s158
      %p170 = scmp.eq.s32.totalorder %s22, 1
      %p171 = por %p169, %p170
      %p173 = scmp.ne.s32.totalorder %s158, %s172
      %p174 = scmp.eq.s32.totalorder %s22, 0
      %p175 = por %p173, %p174
      %s176 = ssub.s32 %s16, %s23
      %p177 = scmp.eq.s32.totalorder %s176, 0
      %s179 = sadd.s32 %s178, 1
      %s180 = scalar_select %p177, %s178, %s179
      %p183 = pneg %p177
      %p184 = scmp.eq.s32.totalorder %s16, 1
      %p185 = por %p183, %p184
      %p186 = scmp.ne.s32.totalorder %s178, %s181
      %p187 = scmp.eq.s32.totalorder %s16, 0
      %p188 = por %p186, %p187
      %p189 = scmp.ne.s32.totalorder %s178, %s181
      %p190 = scmp.eq.s32.totalorder %s21, 1
      %p191 = por %p189, %p190
      %p192 = scmp.ne.s32.totalorder %s181, %s182
      %p193 = scmp.eq.s32.totalorder %s21, 0
      %p194 = por %p192, %p193
      %p195 = scmp.ne.s32.totalorder %s181, %s182
      %p196 = scmp.eq.s32.totalorder %s22, 1
      %p197 = por %p195, %p196
      %p199 = scmp.ne.s32.totalorder %s182, %s198
      %p200 = scmp.eq.s32.totalorder %s22, 0
      %p201 = por %p199, %p200
      %p202 = scmp.le.s32.totalorder 1, %s16
      %p203 = scmp.lt.s32.totalorder %s16, 3
      %p204 = pnand %p202, %p203
      %p205 = pneg %p204
      // Predicated region
      $region9: #{tpu_custom_call.1} parent=5 // pred_check
        _
      $region10: #{tpu_custom_call.1} parent=5 // pred_check_branch
        %207 = sbr.rel (%p204) target = $region12
      $region11: #{tpu_custom_call.1} parent=5 // pred_region
        %s208 = ssub.s32 %s16, 1
        // Predicated region
        $region13: #{tpu_custom_call.1} parent=11 // pred_check
          %p209 = pneg %p63
        $region14: #{tpu_custom_call.1} parent=11 // pred_check_branch
          %211 = sbr.rel (%p209) target = $region16
        $region15: #{tpu_custom_call.1} parent=11 // pred_region
          _
        $region16: #{tpu_custom_call.1} parent=11 // pred_fallthru
          _
        // Predicated region
        $region17: #{tpu_custom_call.1} parent=11 // pred_check
          %p212 = pneg %p84
        $region18: #{tpu_custom_call.1} parent=11 // pred_check_branch
          %214 = sbr.rel (%p212) target = $region20
        $region19: #{tpu_custom_call.1} parent=11 // pred_region
          _
        $region20: #{tpu_custom_call.1} parent=11 // pred_fallthru
          _
        // Predicated region
        $region21: #{tpu_custom_call.1} parent=11 // pred_check
          %p215 = pneg %p105
        $region22: #{tpu_custom_call.1} parent=11 // pred_check_branch
          %217 = sbr.rel (%p215) target = $region24
        $region23: #{tpu_custom_call.1} parent=11 // pred_region
          _
        $region24: #{tpu_custom_call.1} parent=11 // pred_fallthru
          _
        // Predicated region
        $region25: #{tpu_custom_call.1} parent=11 // pred_check
          %p218 = pneg %p126
        $region26: #{tpu_custom_call.1} parent=11 // pred_check_branch
          %220 = sbr.rel (%p218) target = $region28
        $region27: #{tpu_custom_call.1} parent=11 // pred_region
          _
        $region28: #{tpu_custom_call.1} parent=11 // pred_fallthru
          _
        // Predicated region
        $region29: #{tpu_custom_call.1} parent=11 // pred_check
          %p221 = pneg %p147
        $region30: #{tpu_custom_call.1} parent=11 // pred_check_branch
          %223 = sbr.rel (%p221) target = $region32
        $region31: #{tpu_custom_call.1} parent=11 // pred_region
          _
        $region32: #{tpu_custom_call.1} parent=11 // pred_fallthru
          _
        // Predicated region
        $region33: #{tpu_custom_call.1} parent=11 // pred_check
          %p224 = pneg %p168
        $region34: #{tpu_custom_call.1} parent=11 // pred_check_branch
          %226 = sbr.rel (%p224) target = $region36
        $region35: #{tpu_custom_call.1} parent=11 // pred_region
          _
        $region36: #{tpu_custom_call.1} parent=11 // pred_fallthru
          _
      $region12: #{tpu_custom_call.1} parent=5 // pred_fallthru
        _
      %p227 = scmp.lt.s32.totalorder %s16, 2
      // Predicated region
      $region37: #{tpu_custom_call.1} parent=5 // pred_check
        %p228 = pneg %p227
      $region38: #{tpu_custom_call.1} parent=5 // pred_check_branch
        %230 = sbr.rel (%p228) target = $region40
      $region39: #{tpu_custom_call.1} parent=5 // pred_region
        // Predicated region
        $region41: #{tpu_custom_call.1} parent=39 // pred_check
          %p231 = pneg %p36
        $region42: #{tpu_custom_call.1} parent=39 // pred_check_branch
          %233 = sbr.rel (%p231) target = $region44
        $region43: #{tpu_custom_call.1} parent=39 // pred_region
          %p234 = scmp.lt.s32.totalorder %s16, 1
          %s235 = scalar_select %p234, %s16, 1
          %s236 = smul.addr %s235, 8
          %s237 = scalar_lea.vmem %s0, %s236
        $region44: #{tpu_custom_call.1} parent=39 // pred_fallthru
          _
      $region40: #{tpu_custom_call.1} parent=5 // pred_fallthru
        _
      %p238 = scmp.le.s32.totalorder 1, %s16
      %p239 = scmp.lt.s32.totalorder %s16, 3
      %p240 = pnand %p238, %p239
      %p241 = pneg %p240
      // Predicated region
      $region45: #{tpu_custom_call.1} parent=5 // pred_check
        _
      $region46: #{tpu_custom_call.1} parent=5 // pred_check_branch
        %243 = sbr.rel (%p240) target = $region48
      $region47: #{tpu_custom_call.1} parent=5 // pred_region
        %s244 = ssub.s32 %s16, 1
        %p245 = scmp.lt.s32.totalorder %s21, 1
        %s246 = scalar_select %p245, %s21, 1
        %s247 = smul.addr %s246, 8
        %s248 = scalar_lea.vmem %s0, %s247
        %p249 = pneg %p42
        %p250 = pneg %p39
        %p251 = pneg %p63
        %p252 = pneg %p60
        %p253 = pneg %p84
        %p254 = pneg %p81
        %p255 = pneg %p105
        %p256 = pneg %p102
        %p257 = pneg %p126
        %p258 = pneg %p123
        %p259 = pneg %p147
        %p260 = pneg %p144
        %p261 = pneg %p168
        %p262 = pneg %p165
        %p263 = pneg %p194
        %p264 = pneg %p191
        %s265 = sand.u32 %s181, 1
        %s266 = scalar_lea.sflag [#allocation3], %s265
        %s267 = sand.u32 %s181, 1
        %s268 = smul.addr %s267, 8
        %s269 = scalar_lea.vmem [#allocation2], %s268
        %p270 = scmp.lt.s32.totalorder %s21, 1
        %s271 = scalar_select %p270, %s21, 1
        %s272 = smul.addr %s271, 8
        %s273 = scalar_lea.vmem %s0, %s272
        %v274 = vld [vmem:[%s273] sm:$0xff]
        %v275 = vld [vmem:[%s1] sm:$0xff]
        %v276 = vld [vmem:[%s1 + $0x8] sm:$0xff]
        %v277 = vld [vmem:[%s1 + $0x10] sm:$0xff]
        %v278 = vld [vmem:[%s1 + $0x18] sm:$0xff]
        %v279 = vld [vmem:[%s2] sm:$0x1]
        %v281 = vperm.slane %v279, 0
        %vm283 = vcmask 261120
        %v285 = vsel %vm283, %v274, 0
        %287 = vmatpush.msra.mxu0 0.0
        %288 = vmatpush.msra.mxu0 0.0
        %289 = vmatpush.msra.mxu0 0.0
        %290 = vmatpush.msra.mxu0 0.0
        %291 = vmatpush.msra.mxu0 0.0
        %292 = vmatpush.msra.mxu0 0.0
        %293 = vmatpush.msra.mxu0 0.0
        %294 = vmatpush.msra.mxu0 0.0
        %295 = vmatpush.msra.mxu0 0.0
        %296 = vmatpush.msra.mxu0 0.0
        %297 = vmatpush.msra.mxu0 0.0
        %298 = vmatpush.msra.mxu0 0.0
        %299 = vmatpush.msra.mxu0 %v278
        %300 = vmatpush.msra.mxu0 %v277
        %301 = vmatpush.msra.mxu0 %v276
        %302 = vmatpush.msra.mxu0 %v275
        %303 = vmatmul.f32.gmra.mxu0 %v285
        %v304 = vpop.f32.mrf.mxu0
        %v305 = vadd.f32 %v281, %v304
        %306 = vdwg.mxu0
        %v307 = vmax.f32 %v305, 0.0
        %v308 = vld [vmem:[%s3] sm:$0xff]
        %v309 = vld [vmem:[%s3 + $0x8] sm:$0xff]
        %v310 = vld [vmem:[%s3 + $0x10] sm:$0xff]
        %v311 = vld [vmem:[%s3 + $0x18] sm:$0xff]
        %v312 = vld [vmem:[%s3 + $0x20] sm:$0xff]
        %v313 = vld [vmem:[%s3 + $0x28] sm:$0xff]
        %v314 = vld [vmem:[%s3 + $0x30] sm:$0xff]
        %v315 = vld [vmem:[%s3 + $0x38] sm:$0xff]
        %v316 = vld [vmem:[%s4] sm:$0x1]
        %v318 = vperm.slane %v316, 0
        %vm320 = vcmask 523264
        %v322 = vsel %vm320, %v307, 0
        %324 = vmatpush.msra.mxu0 0.0
        %325 = vmatpush.msra.mxu0 0.0
        %326 = vmatpush.msra.mxu0 0.0
        %327 = vmatpush.msra.mxu0 0.0
        %328 = vmatpush.msra.mxu0 0.0
        %329 = vmatpush.msra.mxu0 0.0
        %330 = vmatpush.msra.mxu0 0.0
        %331 = vmatpush.msra.mxu0 0.0
        %332 = vmatpush.msra.mxu0 %v315
        %333 = vmatpush.msra.mxu0 %v314
        %334 = vmatpush.msra.mxu0 %v313
        %335 = vmatpush.msra.mxu0 %v312
        %336 = vmatpush.msra.mxu0 %v311
        %337 = vmatpush.msra.mxu0 %v310
        %338 = vmatpush.msra.mxu0 %v309
        %339 = vmatpush.msra.mxu0 %v308
        %340 = vmatmul.f32.gmra.mxu0 %v322
        %v341 = vpop.f32.mrf.mxu0
        %v342 = vadd.f32 %v318, %v341
        %343 = vdwg.mxu0
        %v344 = vadd.f32 %v342, %v274
        %v345 = vsel %vm283, %v344, 0.0
        %346 = vadd.xlane.f32.xlu0 %v345
        %v347 = vpop.xlane.xlu0 %346
        %v348 = vrcp.pop 32.0
        %v349 = vmul.f32 32.0, %v348
        %v350 = vsub.f32 1.0, %v349
        %v351 = vmul.f32 %v348, %v350
        %v352 = vadd.f32 %v348, %v351
        %vm353 = vweird.f32 %v348
        %v354 = vsel %vm353, %v348, %v352
        %v355 = vmul.f32 %v347, %v354
        %v356 = vsub.f32 %v344, %v355
        %v357 = vmul.f32 %v356, %v356
        %v358 = vsel %vm283, %v357, 0.0
        %359 = vadd.xlane.f32.xlu0 %v358
        %v360 = vpop.xlane.xlu0 %359
        %v361 = vrcp.pop 31.0
        %v362 = vmul.f32 31.0, %v361
        %v363 = vsub.f32 1.0, %v362
        %v364 = vmul.f32 %v361, %v363
        %v365 = vadd.f32 %v361, %v364
        %vm366 = vweird.f32 %v361
        %v367 = vsel %vm366, %v361, %v365
        %v368 = vmul.f32 %v360, %v367
        %v369 = vrsqrt.pop %v368
        %v370 = vmul.f32 %v369, %v368
        %v371 = vmul.f32 %v370, %v369
        %v372 = vmul.f32 0.5, %v371
        %v373 = vsub.f32 1.5, %v372
        %v374 = vmul.f32 %v369, %v373
        %v375 = vmul.f32 %v368, %v374
        %vm376 = vcmp.eq.f32.partialorder %v368, inf
        %v377 = vsel %vm376, %v368, %v375
        %vm378 = vcmp.eq.f32.partialorder %v368, 0.0
        %v379 = vand.u32 %v368, 2147483648
        %v380 = vsel %vm378, %v379, %v377
        %v381 = vadd.f32 %v380, 1e-06
        %v382 = vrcp.pop %v381
        %v383 = vld [vmem:[%s5] sm:$0x1]
        %v385 = vperm.slane %v383, 0
        %v387 = vmul.f32 %v385, %v356
        %v388 = vmul.f32 %v387, %v382
        %v389 = vld [vmem:[%s6] sm:$0x1]
        %v391 = vperm.slane %v389, 0
        %v393 = vadd.f32 %v388, %v391
        %394 = vst.msk [vmem:[%s269] sm:$0xff] %vm283, %v393
        %s395 = sand.u32 %s181, 1
        %s396 = scalar_lea.sflag [#allocation3], %s395
        %s397 = sand.u32 %s181, 1
        %s398 = smul.addr %s397, 8
        %s399 = scalar_lea.vmem [#allocation2], %s398
        // Predicated region
        $region49: #{tpu_custom_call.1} parent=47 // pred_check
          %p400 = pneg %p191
        $region50: #{tpu_custom_call.1} parent=47 // pred_check_branch
          %402 = sbr.rel (%p400) target = $region52
        $region51: #{tpu_custom_call.1} parent=47 // pred_region
          %404 = vsyncadd %s396, 0
          %s405 = smul.addr %s21, 8
          %s406 = scalar_lea.hbm %s7, %s405
          %s408 = sshll.u32 %s399, 4
          %s409 = int_to_ptr.vmem [resolvable:$true] %s408
          %s410 = sshll.u32 %s406, 4
          %s411 = int_to_ptr.hbm [resolvable:$true] %s410
          %413 = dma.vmem_to_hbm [thread:$0]  %s409, 128, %s411, %s396
        $region52: #{tpu_custom_call.1} parent=47 // pred_fallthru
          _
      $region48: #{tpu_custom_call.1} parent=5 // pred_fallthru
        _
      %p414 = scmp.le.s32.totalorder 2, %s16
      // Predicated region
      $region53: #{tpu_custom_call.1} parent=5 // pred_check
        %p415 = pneg %p414
      $region54: #{tpu_custom_call.1} parent=5 // pred_check_branch
        %417 = sbr.rel (%p415) target = $region56
      $region55: #{tpu_custom_call.1} parent=5 // pred_region
        %s418 = ssub.s32 %s16, 2
        // Predicated region
        $region57: #{tpu_custom_call.1} parent=55 // pred_check
          %p419 = pneg %p197
        $region58: #{tpu_custom_call.1} parent=55 // pred_check_branch
          %421 = sbr.rel (%p419) target = $region60
        $region59: #{tpu_custom_call.1} parent=55 // pred_region
          %s422 = sand.u32 %s182, 1
          %s423 = scalar_lea.sflag [#allocation3], %s422
          %s424 = sand.u32 %s182, 1
          %s425 = smul.addr %s424, 8
          %s426 = scalar_lea.vmem [#allocation2], %s425
          %428 = dma.done %s423, 128
        $region60: #{tpu_custom_call.1} parent=55 // pred_fallthru
          _
      $region56: #{tpu_custom_call.1} parent=5 // pred_fallthru
        _
    $region6: #{tpu_custom_call.1} parent=1 // loop_footer
      %s20 = sadd.s32 1, %s16
    $region7: #{tpu_custom_call.1} parent=1 // loop_footer_branch
      %15 = sbr.rel target = $region3
    $region8: #{tpu_custom_call.1} parent=1 // loop_exit
      _
    %429 = vsyncpa [#allocation3], 1
    %s430 = scalar_lea.sflag [#allocation3], 1
    %431 = vsyncpa %s430, 1

</llo_original>
